<compile_context>
chip_gen: v7x
topology: tpu7x:2x2x1
jax: 0.10.0
libtpu: 0.0.40
codegen_flags: <defaults>
</compile_context>

<pallas_src>
import functools

import jax
import jax.numpy as jnp
from jax.experimental import pallas as pl
from jax.experimental.pallas import tpu as pltpu


def _round_up(n, m):
    return ((n + m - 1) // m) * m


def _cdiv(a, b):
    return (a + b - 1) // b


def mvdnn_kernel(x_ref, w0_ref, b0_ref, w1_ref, b1_ref, w2_ref, b2_ref, o_ref):
    # layer 0: a = relu(x @ W0 + b0)
    a = jnp.dot(x_ref[...], w0_ref[...], preferred_element_type=jnp.float32) + b0_ref[...]
    a = jnp.maximum(a, 0.0)
    # layer 1 (hidden): a = relu(a @ W1 + b1)
    a = jnp.dot(a, w1_ref[...], preferred_element_type=jnp.float32) + b1_ref[...]
    a = jnp.maximum(a, 0.0)
    # output layer: z = a @ W2 + b2   (unpadded: y_size lanes only)
    z = jnp.dot(a, w2_ref[...], preferred_element_type=jnp.float32) + b2_ref[...]
    # MvDnn head: z[:, 0] = softplus(z[:, 0]) + 1e-6
    # Narrow softplus on column 0 only (EUP work on 1 lane/row); merge with a
    # broadcasted where so there is a single full store to the output tile.
    sp0 = jax.nn.softplus(z[:, 0:1]) + 1e-6                      # (tm, 1)
    col = jax.lax.broadcasted_iota(jnp.int32, z.shape, 1)        # (tm, y_size)
    o_ref[...] = jnp.where(col == 0, sp0, z).astype(o_ref.dtype)


@functools.partial(jax.jit, static_argnames=("tm",))
def _mvdnn_call(x_pad, W0, b0, W1, b1, W2, b2, *, tm):
    Bp, x_size = x_pad.shape
    y_size = W2.shape[1]
    grid = (Bp // tm,)

    resident = lambda shape: pl.BlockSpec(shape, lambda i: (0, 0))

    return pl.pallas_call(
        mvdnn_kernel,
        out_shape=jax.ShapeDtypeStruct((Bp, y_size), x_pad.dtype),
        grid=grid,
        in_specs=[
            pl.BlockSpec((tm, x_size), lambda i: (i, 0)),   # batch-tiled input
            resident(W0.shape), resident(b0.shape),          # weights stay in VMEM
            resident(W1.shape), resident(b1.shape),
            resident(W2.shape), resident(b2.shape),
        ],
        # Unpadded output tile: last dim == full array extent, tm multiple of 8.
        out_specs=pl.BlockSpec((tm, y_size), lambda i: (i, 0)),
        compiler_params=pltpu.CompilerParams(dimension_semantics=("parallel",)),
    )(x_pad, W0, b0, W1, b1, W2, b2)


def mvdnn_forward(x, params, *, tm_target=1024):
    """Full MvDnn forward in one Pallas kernel. x: (B, x_size), f32 or bf16."""
    W0, W1, W2 = params["W"]
    b0, b1, b2 = params["b"]
    B = x.shape[0]

    # Tile selection:
    #  * n_tiles = cdiv(B, tm_target) first, then tm = round_up(cdiv(B, n_tiles), 8),
    #    so batch padding is at most a few rows (not up to a full tile).
    #  * Force >= 2 (even) tiles when the batch is big enough so the "parallel" grid
    #    axis can shard across v7x's two TensorCores.
    n_tiles = _cdiv(B, tm_target)
    if B >= 16:
        n_tiles = max(2, n_tiles)
        n_tiles = _round_up(n_tiles, 2)
    else:
        n_tiles = 1
    tm = _round_up(max(_cdiv(B, n_tiles), 1), 8)
    Bp = tm * n_tiles
    x_pad = x if Bp == B else jnp.pad(x, ((0, Bp - B), (0, 0)))

    out = _mvdnn_call(x_pad, W0, b0, W1, b1, W2, b2, tm=tm)
    return out[:B, :]


def xavier_uniform(key, shape, dtype=jnp.float32):
    fan_in, fan_out = shape
    limit = jnp.sqrt(6.0 / (fan_in + fan_out))
    return jax.random.uniform(key, shape, dtype, minval=-limit, maxval=limit)


def init_params(key, x_size, h_size, y_size):
    dims = [x_size] + list(h_size) + [y_size]
    Ws, bs = [], []
    keys = jax.random.split(key, len(dims) - 1)
    for i in range(len(dims) - 1):
        Ws.append(xavier_uniform(keys[i], (dims[i], dims[i + 1])))
        bs.append(jnp.zeros((1, dims[i + 1]), jnp.float32))
    return {"W": Ws, "b": bs}


def reference_forward(x, params):
    W, b = params["W"], params["b"]
    a = jnp.maximum(x @ W[0] + b[0], 0.0)
    for i in range(1, len(W) - 1):
        a = jnp.maximum(a @ W[i] + b[i], 0.0)
    z = a @ W[-1] + b[-1]
    z0 = jax.nn.softplus(z[:, 0]) + 1e-6
    return z.at[:, 0].set(z0)


if __name__ == "__main__":
    key = jax.random.PRNGKey(0)
    kx, kp, kx2 = jax.random.split(key, 3)

    # Small shapes consistent with the module (2 hidden layers).
    batch, x_size, h_size, y_size = 8, 32, (64, 32), 8
    x = jax.random.normal(kx, (batch, x_size), jnp.float32)
    params = init_params(kp, x_size, h_size, y_size)

    out = jax.block_until_ready(mvdnn_forward(x, params))
    ref = reference_forward(x, params)
    assert out.shape == (batch, y_size)
    assert jnp.allclose(out, ref, atol=1e-5, rtol=1e-5)

    # Also exercise the multi-tile path (B > 16, non-multiple of the tile).
    big_batch = 600
    x_big = jax.random.normal(kx2, (big_batch, x_size), jnp.float32)
    out_big = jax.block_until_ready(mvdnn_forward(x_big, params))
    ref_big = reference_forward(x_big, params)
    assert out_big.shape == (big_batch, y_size)
    assert jnp.allclose(out_big, ref_big, atol=1e-5, rtol=1e-5)

    print("KERNEL_OK")
</pallas_src>

<mosaic_0001>
module attributes {stable_mosaic.version = 11 : i64} {
  func.func @mvdnn_kernel(%arg0: i32, %arg1: memref<8x32xf32, #tpu.memory_space<vmem>>, %arg2: memref<32x64xf32, #tpu.memory_space<vmem>>, %arg3: memref<1x64xf32, #tpu.memory_space<vmem>>, %arg4: memref<64x32xf32, #tpu.memory_space<vmem>>, %arg5: memref<1x32xf32, #tpu.memory_space<vmem>>, %arg6: memref<32x8xf32, #tpu.memory_space<vmem>>, %arg7: memref<1x8xf32, #tpu.memory_space<vmem>>, %arg8: memref<8x8xf32, #tpu.memory_space<vmem>>) attributes {dimension_semantics = [#tpu.dimension_semantics<parallel>], iteration_bounds = array<i64: 1>, scalar_prefetch = 0 : i64, scratch_operands = 0 : i64, tpu.core_type = #tpu.core_type<tc>, window_params = [{transform_indices = @transform_0, window_bounds = array<i64: 8, 32>}, {pipeline_mode = #tpu.pipeline_mode<synchronous>, transform_indices = @transform_1, window_bounds = array<i64: 32, 64>}, {pipeline_mode = #tpu.pipeline_mode<synchronous>, transform_indices = @transform_2, window_bounds = array<i64: 1, 64>}, {pipeline_mode = #tpu.pipeline_mode<synchronous>, transform_indices = @transform_3, window_bounds = array<i64: 64, 32>}, {pipeline_mode = #tpu.pipeline_mode<synchronous>, transform_indices = @transform_4, window_bounds = array<i64: 1, 32>}, {pipeline_mode = #tpu.pipeline_mode<synchronous>, transform_indices = @transform_5, window_bounds = array<i64: 32, 8>}, {pipeline_mode = #tpu.pipeline_mode<synchronous>, transform_indices = @transform_6, window_bounds = array<i64: 1, 8>}, {transform_indices = @transform_7, window_bounds = array<i64: 8, 8>}]} {
    %c0 = arith.constant 0 : index
    %c0_0 = arith.constant 0 : index
    %0 = vector.load %arg1[%c0, %c0_0] : memref<8x32xf32, #tpu.memory_space<vmem>>, vector<8x32xf32>
    %c0_1 = arith.constant 0 : index
    %c0_2 = arith.constant 0 : index
    %1 = vector.load %arg2[%c0_1, %c0_2] : memref<32x64xf32, #tpu.memory_space<vmem>>, vector<32x64xf32>
    %cst = arith.constant dense<0.000000e+00> : vector<8x64xf32>
    %2 = tpu.matmul %0, %1, %cst {dimension_numbers = #tpu.dot_dimension_numbers<[1], [0], [0], [1], [0, 0, 1, 1], [], []>} : vector<8x32xf32>, vector<32x64xf32>, vector<8x64xf32> -> vector<8x64xf32>
    %c0_3 = arith.constant 0 : index
    %c0_4 = arith.constant 0 : index
    %3 = vector.load %arg3[%c0_3, %c0_4] : memref<1x64xf32, #tpu.memory_space<vmem>>, vector<1x64xf32>
    %4 = vector.broadcast %3 : vector<1x64xf32> to vector<8x64xf32>
    %5 = arith.addf %2, %4 : vector<8x64xf32>
    %cst_5 = arith.constant 0.000000e+00 : f32
    %6 = vector.broadcast %cst_5 : f32 to vector<8x64xf32>
    %7 = arith.maximumf %5, %6 : vector<8x64xf32>
    %c0_6 = arith.constant 0 : index
    %c0_7 = arith.constant 0 : index
    %8 = vector.load %arg4[%c0_6, %c0_7] : memref<64x32xf32, #tpu.memory_space<vmem>>, vector<64x32xf32>
    %cst_8 = arith.constant dense<0.000000e+00> : vector<8x32xf32>
    %9 = tpu.matmul %7, %8, %cst_8 {dimension_numbers = #tpu.dot_dimension_numbers<[1], [0], [0], [1], [0, 0, 1, 1], [], []>} : vector<8x64xf32>, vector<64x32xf32>, vector<8x32xf32> -> vector<8x32xf32>
    %c0_9 = arith.constant 0 : index
    %c0_10 = arith.constant 0 : index
    %10 = vector.load %arg5[%c0_9, %c0_10] : memref<1x32xf32, #tpu.memory_space<vmem>>, vector<1x32xf32>
    %11 = vector.broadcast %10 : vector<1x32xf32> to vector<8x32xf32>
    %12 = arith.addf %9, %11 : vector<8x32xf32>
    %cst_11 = arith.constant 0.000000e+00 : f32
    %13 = vector.broadcast %cst_11 : f32 to vector<8x32xf32>
    %14 = arith.maximumf %12, %13 : vector<8x32xf32>
    %c0_12 = arith.constant 0 : index
    %c0_13 = arith.constant 0 : index
    %15 = vector.load %arg6[%c0_12, %c0_13] : memref<32x8xf32, #tpu.memory_space<vmem>>, vector<32x8xf32>
    %cst_14 = arith.constant dense<0.000000e+00> : vector<8x8xf32>
    %16 = tpu.matmul %14, %15, %cst_14 {dimension_numbers = #tpu.dot_dimension_numbers<[1], [0], [0], [1], [0, 0, 1, 1], [], []>} : vector<8x32xf32>, vector<32x8xf32>, vector<8x8xf32> -> vector<8x8xf32>
    %c0_15 = arith.constant 0 : index
    %c0_16 = arith.constant 0 : index
    %17 = vector.load %arg7[%c0_15, %c0_16] : memref<1x8xf32, #tpu.memory_space<vmem>>, vector<1x8xf32>
    %18 = vector.broadcast %17 : vector<1x8xf32> to vector<8x8xf32>
    %19 = arith.addf %16, %18 : vector<8x8xf32>
    %20 = vector.extract_strided_slice %19 {offsets = [0, 0], sizes = [8, 1], strides = [1, 1]} : vector<8x8xf32> to vector<8x1xf32>
    %cst_17 = arith.constant 0.000000e+00 : f32
    %21 = vector.broadcast %cst_17 : f32 to vector<8x1xf32>
    %22 = arith.maximumf %20, %21 : vector<8x1xf32>
    %23 = vector.broadcast %cst_17 : f32 to vector<8x1xf32>
    %24 = arith.subf %20, %23 : vector<8x1xf32>
    %25 = arith.cmpf one, %24, %24 : vector<8x1xf32>
    %26 = vector.broadcast %cst_17 : f32 to vector<8x1xf32>
    %27 = arith.addf %20, %26 : vector<8x1xf32>
    %28 = math.absf %24 : vector<8x1xf32>
    %cst_18 = arith.constant 0.000000e+00 : f32
    %29 = vector.broadcast %cst_18 : f32 to vector<8x1xf32>
    %30 = arith.subf %29, %28 : vector<8x1xf32>
    %31 = math.exp %30 : vector<8x1xf32>
    %32 = math.log1p %31 : vector<8x1xf32>
    %33 = arith.addf %22, %32 : vector<8x1xf32>
    %34 = arith.select %25, %27, %33 : vector<8x1xi1>, vector<8x1xf32>
    %cst_19 = arith.constant 9.99999997E-7 : f32
    %35 = vector.broadcast %cst_19 : f32 to vector<8x1xf32>
    %36 = arith.addf %34, %35 : vector<8x1xf32>
    %37 = tpu.iota {dimensions = array<i32: 1>} : vector<8x8xi32>
    %c0_i32 = arith.constant 0 : i32
    %38 = vector.broadcast %c0_i32 : i32 to vector<8x8xi32>
    %39 = arith.cmpi eq, %37, %38 : vector<8x8xi32>
    %40 = vector.shape_cast %36 : vector<8x1xf32> to vector<8x1xf32>
    %41 = vector.broadcast %40 : vector<8x1xf32> to vector<8x8xf32>
    %42 = arith.select %39, %41, %19 : vector<8x8xi1>, vector<8x8xf32>
    %c0_20 = arith.constant 0 : index
    %c0_21 = arith.constant 0 : index
    %43 = vector.load %arg8[%c0_20, %c0_21] : memref<8x8xf32, #tpu.memory_space<vmem>>, vector<8x8xf32>
    tpu.vector_store %arg8[%c0_20, %c0_21], %42 {strides = array<i32>} : memref<8x8xf32, #tpu.memory_space<vmem>>, vector<8x8xf32>,
    return
  }
  func.func @transform_0(%arg0: i32) -> (i32, i32) {
    %c0_i32 = arith.constant 0 : i32
    %c0_i32_0 = arith.constant 0 : i32
    return %arg0, %c0_i32 : i32, i32
  }
  func.func @transform_1(%arg0: i32) -> (i32, i32) {
    %c0_i32 = arith.constant 0 : i32
    %c0_i32_0 = arith.constant 0 : i32
    %c0_i32_1 = arith.constant 0 : i32
    return %c0_i32, %c0_i32_0 : i32, i32
  }
  func.func @transform_2(%arg0: i32) -> (i32, i32) {
    %c0_i32 = arith.constant 0 : i32
    %c0_i32_0 = arith.constant 0 : i32
    %c0_i32_1 = arith.constant 0 : i32
    return %c0_i32, %c0_i32_0 : i32, i32
  }
  func.func @transform_3(%arg0: i32) -> (i32, i32) {
    %c0_i32 = arith.constant 0 : i32
    %c0_i32_0 = arith.constant 0 : i32
    %c0_i32_1 = arith.constant 0 : i32
    return %c0_i32, %c0_i32_0 : i32, i32
  }
  func.func @transform_4(%arg0: i32) -> (i32, i32) {
    %c0_i32 = arith.constant 0 : i32
    %c0_i32_0 = arith.constant 0 : i32
    %c0_i32_1 = arith.constant 0 : i32
    return %c0_i32, %c0_i32_0 : i32, i32
  }
  func.func @transform_5(%arg0: i32) -> (i32, i32) {
    %c0_i32 = arith.constant 0 : i32
    %c0_i32_0 = arith.constant 0 : i32
    %c0_i32_1 = arith.constant 0 : i32
    return %c0_i32, %c0_i32_0 : i32, i32
  }
  func.func @transform_6(%arg0: i32) -> (i32, i32) {
    %c0_i32 = arith.constant 0 : i32
    %c0_i32_0 = arith.constant 0 : i32
    %c0_i32_1 = arith.constant 0 : i32
    return %c0_i32, %c0_i32_0 : i32, i32
  }
  func.func @transform_7(%arg0: i32) -> (i32, i32) {
    %c0_i32 = arith.constant 0 : i32
    %c0_i32_0 = arith.constant 0 : i32
    return %arg0, %c0_i32 : i32, i32
  }
}

</mosaic_0001>

<llo_original>
// kernel: _mvdnn_call.1
$region0: #{_mvdnn_call.1}
  #allocation0 [shape = 'u32[]', space=smem, size = 0x4, offset = 0x4, fixed_abs, tag = 'smem constant byte address 0x4 - core index']
  #allocation1 [shape = 'u32[144,128]{1,0:T(1,128)}', space=vmem, size = 0x12000, scoped, tag = 'internal scratch']
  %s0 = inlined_call_operand.vmem [shape: f32[8,32], index: 0, kind: input, shape index: {}]
  %s1 = inlined_call_operand.vmem [shape: f32[32,64], index: 1, kind: input, shape index: {}]
  %s2 = inlined_call_operand.vmem [shape: f32[1,64], index: 2, kind: input, shape index: {}]
  %s3 = inlined_call_operand.vmem [shape: f32[64,32], index: 3, kind: input, shape index: {}]
  %s4 = inlined_call_operand.vmem [shape: f32[1,32], index: 4, kind: input, shape index: {}]
  %s5 = inlined_call_operand.vmem [shape: f32[32,8], index: 5, kind: input, shape index: {}]
  %s6 = inlined_call_operand.vmem [shape: f32[1,8], index: 6, kind: input, shape index: {}]
  %s7 = inlined_call_operand.hbm [shape: f32[8,8], index: 7, kind: output, shape index: {}]
  %s8 = sld [smem:[#allocation0]]
  $region38: #{_mvdnn_call.1} parent=0
    _
  %s10 = ssub.s32 1, %s8
  %s11 = scalar_select 0, %s10, %s8
  $region1: #{_mvdnn_call.1} parent=0
    #allocation2 [shape = 'u8[4096]{0}', space=vmem, size = 0x1000, scoped, tag = 'output window, operand 0, single buffered']
    #allocation3 [shape = 's32[1]{0}', space=sflag, size = 0x4, scoped, tag = 'scoped memory for _mvdnn_call.1']
    %12 = vsyncpa [#allocation3], 0
    // Predicated region
    $region2: #{_mvdnn_call.1} parent=1 // pred_check
      _
    $region3: #{_mvdnn_call.1} parent=1 // pred_check_branch
      %14 = sbr.rel (0) target = $region5
    $region4: #{_mvdnn_call.1} parent=1 // pred_region
      _
    $region5: #{_mvdnn_call.1} parent=1 // pred_fallthru
      _
    // Predicated region
    $region6: #{_mvdnn_call.1} parent=1 // pred_check
      _
    $region7: #{_mvdnn_call.1} parent=1 // pred_check_branch
      %16 = sbr.rel (0) target = $region9
    $region8: #{_mvdnn_call.1} parent=1 // pred_region
      _
    $region9: #{_mvdnn_call.1} parent=1 // pred_fallthru
      _
    // Predicated region
    $region10: #{_mvdnn_call.1} parent=1 // pred_check
      _
    $region11: #{_mvdnn_call.1} parent=1 // pred_check_branch
      %18 = sbr.rel (0) target = $region13
    $region12: #{_mvdnn_call.1} parent=1 // pred_region
      _
    $region13: #{_mvdnn_call.1} parent=1 // pred_fallthru
      _
    // Predicated region
    $region14: #{_mvdnn_call.1} parent=1 // pred_check
      _
    $region15: #{_mvdnn_call.1} parent=1 // pred_check_branch
      %20 = sbr.rel (0) target = $region17
    $region16: #{_mvdnn_call.1} parent=1 // pred_region
      _
    $region17: #{_mvdnn_call.1} parent=1 // pred_fallthru
      _
    // Predicated region
    $region18: #{_mvdnn_call.1} parent=1 // pred_check
      _
    $region19: #{_mvdnn_call.1} parent=1 // pred_check_branch
      %22 = sbr.rel (0) target = $region21
    $region20: #{_mvdnn_call.1} parent=1 // pred_region
      _
    $region21: #{_mvdnn_call.1} parent=1 // pred_fallthru
      _
    // Predicated region
    $region22: #{_mvdnn_call.1} parent=1 // pred_check
      _
    $region23: #{_mvdnn_call.1} parent=1 // pred_check_branch
      %24 = sbr.rel (0) target = $region25
    $region24: #{_mvdnn_call.1} parent=1 // pred_region
      _
    $region25: #{_mvdnn_call.1} parent=1 // pred_fallthru
      _
    // Predicated region
    $region26: #{_mvdnn_call.1} parent=1 // pred_check
      _
    $region27: #{_mvdnn_call.1} parent=1 // pred_check_branch
      %26 = sbr.rel (0) target = $region29
    $region28: #{_mvdnn_call.1} parent=1 // pred_region
      _
    $region29: #{_mvdnn_call.1} parent=1 // pred_fallthru
      _
    %v27 = vld [vmem:[%s0] sm:$0xff]
    %v28 = vld [vmem:[%s1] sm:$0xff]
    %v29 = vld [vmem:[%s1 + $0x8] sm:$0xff]
    %v30 = vld [vmem:[%s1 + $0x10] sm:$0xff]
    %v31 = vld [vmem:[%s1 + $0x18] sm:$0xff]
    %v32 = vld [vmem:[%s2] sm:$0x1]
    %v34 = vlaneseq
    %v35 = vshrl.u32 %v34, 7
    %v36 = vsub.s32 0, %v35
    %v37 = vrot.slane %v32, %v36
    %vm39 = vcmask 261120
    %v41 = vsel %vm39, %v27, 0
    %43 = vmatprep.subr.mxu0 0.0
    %44 = vmatpush1.msra.mxu0 %v28
    %45 = vmatprep.subr.mxu0 0.0
    %46 = vmatpush1.msra.mxu0 %v29
    %47 = vmatprep.subr.mxu0 0.0
    %48 = vmatpush1.msra.mxu0 %v30
    %49 = vmatprep.subr.mxu0 0.0
    %50 = vmatpush1.msra.mxu0 %v31
    %51 = vmatprep.subr.mxu0 0.0
    %52 = vmatpush1.msra.mxu0 0.0
    %53 = vmatprep.subr.mxu0 0.0
    %54 = vmatpush1.msra.mxu0 0.0
    %55 = vmatprep.subr.mxu0 0.0
    %56 = vmatpush1.msra.mxu0 0.0
    %57 = vmatprep.subr.mxu0 0.0
    %58 = vmatpush1.msra.mxu0 0.0
    %59 = vmatprep.subr.mxu0 0.0
    %60 = vmatpush1.msra.mxu0 0.0
    %61 = vmatprep.subr.mxu0 0.0
    %62 = vmatpush1.msra.mxu0 0.0
    %63 = vmatprep.subr.mxu0 0.0
    %64 = vmatpush1.msra.mxu0 0.0
    %65 = vmatprep.subr.mxu0 0.0
    %66 = vmatpush1.msra.mxu0 0.0
    %67 = vmatprep.subr.mxu0 0.0
    %68 = vmatpush1.msra.mxu0 0.0
    %69 = vmatprep.subr.mxu0 0.0
    %70 = vmatpush1.msra.mxu0 0.0
    %71 = vmatprep.subr.mxu0 0.0
    %72 = vmatpush1.msra.mxu0 0.0
    %73 = vmatprep.subr.mxu0 0.0
    %74 = vmatpush1.msra.mxu0 0.0
    %75 = vmatprep.subr.mxu0 0.0
    %76 = vmatpush1.msra.mxu0 0.0
    %77 = vmatprep.subr.mxu0 0.0
    %78 = vmatpush1.msra.mxu0 0.0
    %79 = vmatprep.subr.mxu0 0.0
    %80 = vmatpush1.msra.mxu0 0.0
    %81 = vmatprep.subr.mxu0 0.0
    %82 = vmatpush1.msra.mxu0 0.0
    %83 = vmatprep.subr.mxu0 0.0
    %84 = vmatpush1.msra.mxu0 0.0
    %85 = vmatprep.subr.mxu0 0.0
    %86 = vmatpush1.msra.mxu0 0.0
    %87 = vmatprep.subr.mxu0 0.0
    %88 = vmatpush1.msra.mxu0 0.0
    %89 = vmatprep.subr.mxu0 0.0
    %90 = vmatpush1.msra.mxu0 0.0
    %91 = vmatprep.subr.mxu0 0.0
    %92 = vmatpush1.msra.mxu0 0.0
    %93 = vmatprep.subr.mxu0 0.0
    %94 = vmatpush1.msra.mxu0 0.0
    %95 = vmatprep.subr.mxu0 0.0
    %96 = vmatpush1.msra.mxu0 0.0
    %97 = vmatprep.subr.mxu0 0.0
    %98 = vmatpush1.msra.mxu0 0.0
    %99 = vmatprep.subr.mxu0 0.0
    %100 = vmatpush1.msra.mxu0 0.0
    %101 = vmatprep.subr.mxu0 0.0
    %102 = vmatpush1.msra.mxu0 0.0
    %103 = vmatprep.subr.mxu0 0.0
    %104 = vmatpush1.msra.mxu0 0.0
    %105 = vmatprep.subr.mxu0 0.0
    %106 = vmatpush1.msra.mxu0 0.0
    %107 = vmatprep.mubr.f32.mxu0 0.0
    %108 = vmatmul.mubr.f32.gmra.mrb[0].mxu0 %v41
    %v109 = vpop.f32.mrb[0].mxu0
    %v110 = vadd.f32 %v37, %v109
    %v111 = vpop.f32.mrb[0].mxu0
    %112 = vdwg.mxu0
    %v113 = vmax.f32 %v110, 0.0
    %v114 = vld [vmem:[%s3] sm:$0xff]
    %v115 = vld [vmem:[%s3 + $0x8] sm:$0xff]
    %v116 = vld [vmem:[%s3 + $0x10] sm:$0xff]
    %v117 = vld [vmem:[%s3 + $0x18] sm:$0xff]
    %v118 = vld [vmem:[%s3 + $0x20] sm:$0xff]
    %v119 = vld [vmem:[%s3 + $0x28] sm:$0xff]
    %v120 = vld [vmem:[%s3 + $0x30] sm:$0xff]
    %v121 = vld [vmem:[%s3 + $0x38] sm:$0xff]
    %v122 = vld [vmem:[%s4] sm:$0x1]
    %v124 = vlaneseq
    %v125 = vshrl.u32 %v124, 7
    %v126 = vsub.s32 0, %v125
    %v127 = vrot.slane %v122, %v126
    %vm129 = vcmask 523264
    %v131 = vsel %vm129, %v113, 0
    %133 = vmatprep.subr.mxu0 0.0
    %134 = vmatpush1.msra.mxu0 %v114
    %135 = vmatprep.subr.mxu0 0.0
    %136 = vmatpush1.msra.mxu0 %v115
    %137 = vmatprep.subr.mxu0 0.0
    %138 = vmatpush1.msra.mxu0 %v116
    %139 = vmatprep.subr.mxu0 0.0
    %140 = vmatpush1.msra.mxu0 %v117
    %141 = vmatprep.subr.mxu0 0.0
    %142 = vmatpush1.msra.mxu0 %v118
    %143 = vmatprep.subr.mxu0 0.0
    %144 = vmatpush1.msra.mxu0 %v119
    %145 = vmatprep.subr.mxu0 0.0
    %146 = vmatpush1.msra.mxu0 %v120
    %147 = vmatprep.subr.mxu0 0.0
    %148 = vmatpush1.msra.mxu0 %v121
    %149 = vmatprep.subr.mxu0 0.0
    %150 = vmatpush1.msra.mxu0 0.0
    %151 = vmatprep.subr.mxu0 0.0
    %152 = vmatpush1.msra.mxu0 0.0
    %153 = vmatprep.subr.mxu0 0.0
    %154 = vmatpush1.msra.mxu0 0.0
    %155 = vmatprep.subr.mxu0 0.0
    %156 = vmatpush1.msra.mxu0 0.0
    %157 = vmatprep.subr.mxu0 0.0
    %158 = vmatpush1.msra.mxu0 0.0
    %159 = vmatprep.subr.mxu0 0.0
    %160 = vmatpush1.msra.mxu0 0.0
    %161 = vmatprep.subr.mxu0 0.0
    %162 = vmatpush1.msra.mxu0 0.0
    %163 = vmatprep.subr.mxu0 0.0
    %164 = vmatpush1.msra.mxu0 0.0
    %165 = vmatprep.subr.mxu0 0.0
    %166 = vmatpush1.msra.mxu0 0.0
    %167 = vmatprep.subr.mxu0 0.0
    %168 = vmatpush1.msra.mxu0 0.0
    %169 = vmatprep.subr.mxu0 0.0
    %170 = vmatpush1.msra.mxu0 0.0
    %171 = vmatprep.subr.mxu0 0.0
    %172 = vmatpush1.msra.mxu0 0.0
    %173 = vmatprep.subr.mxu0 0.0
    %174 = vmatpush1.msra.mxu0 0.0
    %175 = vmatprep.subr.mxu0 0.0
    %176 = vmatpush1.msra.mxu0 0.0
    %177 = vmatprep.subr.mxu0 0.0
    %178 = vmatpush1.msra.mxu0 0.0
    %179 = vmatprep.subr.mxu0 0.0
    %180 = vmatpush1.msra.mxu0 0.0
    %181 = vmatprep.subr.mxu0 0.0
    %182 = vmatpush1.msra.mxu0 0.0
    %183 = vmatprep.subr.mxu0 0.0
    %184 = vmatpush1.msra.mxu0 0.0
    %185 = vmatprep.subr.mxu0 0.0
    %186 = vmatpush1.msra.mxu0 0.0
    %187 = vmatprep.subr.mxu0 0.0
    %188 = vmatpush1.msra.mxu0 0.0
    %189 = vmatprep.subr.mxu0 0.0
    %190 = vmatpush1.msra.mxu0 0.0
    %191 = vmatprep.subr.mxu0 0.0
    %192 = vmatpush1.msra.mxu0 0.0
    %193 = vmatprep.subr.mxu0 0.0
    %194 = vmatpush1.msra.mxu0 0.0
    %195 = vmatprep.subr.mxu0 0.0
    %196 = vmatpush1.msra.mxu0 0.0
    %197 = vmatprep.mubr.f32.mxu0 0.0
    %198 = vmatmul.mubr.f32.gmra.mrb[0].mxu0 %v131
    %v199 = vpop.f32.mrb[0].mxu0
    %v200 = vadd.f32 %v127, %v199
    %v201 = vpop.f32.mrb[0].mxu0
    %202 = vdwg.mxu0
    %v203 = vmax.f32 %v200, 0.0
    %v204 = vld [vmem:[%s5] sm:$0xff]
    %v205 = vld [vmem:[%s5 + $0x8] sm:$0xff]
    %v206 = vld [vmem:[%s5 + $0x10] sm:$0xff]
    %v207 = vld [vmem:[%s5 + $0x18] sm:$0xff]
    %v208 = vld [vmem:[%s6] sm:$0x1]
    %v210 = vlaneseq
    %v211 = vshrl.u32 %v210, 7
    %v212 = vsub.s32 0, %v211
    %v213 = vrot.slane %v208, %v212
    %v216 = vsel %vm39, %v203, 0
    %218 = vmatprep.subr.mxu0 0.0
    %219 = vmatpush1.msra.mxu0 %v204
    %220 = vmatprep.subr.mxu0 0.0
    %221 = vmatpush1.msra.mxu0 %v205
    %222 = vmatprep.subr.mxu0 0.0
    %223 = vmatpush1.msra.mxu0 %v206
    %224 = vmatprep.subr.mxu0 0.0
    %225 = vmatpush1.msra.mxu0 %v207
    %226 = vmatprep.subr.mxu0 0.0
    %227 = vmatpush1.msra.mxu0 0.0
    %228 = vmatprep.subr.mxu0 0.0
    %229 = vmatpush1.msra.mxu0 0.0
    %230 = vmatprep.subr.mxu0 0.0
    %231 = vmatpush1.msra.mxu0 0.0
    %232 = vmatprep.subr.mxu0 0.0
    %233 = vmatpush1.msra.mxu0 0.0
    %234 = vmatprep.subr.mxu0 0.0
    %235 = vmatpush1.msra.mxu0 0.0
    %236 = vmatprep.subr.mxu0 0.0
    %237 = vmatpush1.msra.mxu0 0.0
    %238 = vmatprep.subr.mxu0 0.0
    %239 = vmatpush1.msra.mxu0 0.0
    %240 = vmatprep.subr.mxu0 0.0
    %241 = vmatpush1.msra.mxu0 0.0
    %242 = vmatprep.subr.mxu0 0.0
    %243 = vmatpush1.msra.mxu0 0.0
    %244 = vmatprep.subr.mxu0 0.0
    %245 = vmatpush1.msra.mxu0 0.0
    %246 = vmatprep.subr.mxu0 0.0
    %247 = vmatpush1.msra.mxu0 0.0
    %248 = vmatprep.subr.mxu0 0.0
    %249 = vmatpush1.msra.mxu0 0.0
    %250 = vmatprep.subr.mxu0 0.0
    %251 = vmatpush1.msra.mxu0 0.0
    %252 = vmatprep.subr.mxu0 0.0
    %253 = vmatpush1.msra.mxu0 0.0
    %254 = vmatprep.subr.mxu0 0.0
    %255 = vmatpush1.msra.mxu0 0.0
    %256 = vmatprep.subr.mxu0 0.0
    %257 = vmatpush1.msra.mxu0 0.0
    %258 = vmatprep.subr.mxu0 0.0
    %259 = vmatpush1.msra.mxu0 0.0
    %260 = vmatprep.subr.mxu0 0.0
    %261 = vmatpush1.msra.mxu0 0.0
    %262 = vmatprep.subr.mxu0 0.0
    %263 = vmatpush1.msra.mxu0 0.0
    %264 = vmatprep.subr.mxu0 0.0
    %265 = vmatpush1.msra.mxu0 0.0
    %266 = vmatprep.subr.mxu0 0.0
    %267 = vmatpush1.msra.mxu0 0.0
    %268 = vmatprep.subr.mxu0 0.0
    %269 = vmatpush1.msra.mxu0 0.0
    %270 = vmatprep.subr.mxu0 0.0
    %271 = vmatpush1.msra.mxu0 0.0
    %272 = vmatprep.subr.mxu0 0.0
    %273 = vmatpush1.msra.mxu0 0.0
    %274 = vmatprep.subr.mxu0 0.0
    %275 = vmatpush1.msra.mxu0 0.0
    %276 = vmatprep.subr.mxu0 0.0
    %277 = vmatpush1.msra.mxu0 0.0
    %278 = vmatprep.subr.mxu0 0.0
    %279 = vmatpush1.msra.mxu0 0.0
    %280 = vmatprep.subr.mxu0 0.0
    %281 = vmatpush1.msra.mxu0 0.0
    %282 = vmatprep.mubr.f32.mxu0 0.0
    %283 = vmatmul.mubr.f32.gmra.mrb[0].mxu0 %v216
    %v284 = vpop.f32.mrb[0].mxu0
    %v285 = vadd.f32 %v213, %v284
    %v286 = vpop.f32.mrb[0].mxu0
    %287 = vdwg.mxu0
    %v288 = vmax.f32 %v285, 0.0
    %vm289 = vcmp.ne.f32.partialorder %v285, %v285
    %v290 = vadd.f32 %v285, 0.0
    %v291 = vand.u32 2147483647, %v285
    %v292 = vsub.f32 0.0, %v291
    %v293 = vmul.f32 %v292, 1.442695
    %v294 = vpow.pop %v293
    %v295 = vadd.f32 %v294, 1.0
    %v296 = vlog2.pop %v295
    %v297 = vmul.f32 %v296, 0.6931472
    %v298 = vmul.f32 -0.5, %v294
    %v299 = vadd.f32 %v298, 1.0
    %v300 = vmul.f32 %v299, %v294
    %v301 = vand.u32 2147483647, %v294
    %vm302 = vcmp.lt.f32.partialorder %v301, 0.0004427343
    %v303 = vsel %vm302, %v300, %v297
    %v304 = vadd.f32 %v288, %v303
    %v305 = vsel %vm289, %v290, %v304
    %v306 = vadd.f32 %v305, 1e-06
    %v307 = vlaneseq
    %v308 = vand.u32 %v307, 127
    %vm309 = vcmp.eq.s32.totalorder %v308, 0
    %311 = vset.pattern.permute.xlu0 0
    %312 = vperm.xlu0 %311, %v306
    %v313 = vpop.permute.xlu0 %312
    %v315 = vsel %vm309, %v313, %v285
    %vm316 = vcmask 64512
    %317 = vst.msk [vmem:[#allocation2] sm:$0xff] %vm316, %v315
    // Predicated region
    $region30: #{_mvdnn_call.1} parent=1 // pred_check
      _
    $region31: #{_mvdnn_call.1} parent=1 // pred_check_branch
      %319 = sbr.rel (0) target = $region33
    $region32: #{_mvdnn_call.1} parent=1 // pred_region
      %s321 = ssub.s32 128, 128
      %322 = vsyncadd [#allocation3], %s321
      %s324 = sshll.u32 [#allocation2], 4
      %s325 = int_to_ptr.vmem [resolvable:$true] %s324
      %327 = dma.vmem_to_hbm [thread:$0]  %s325, 128, %s7, [#allocation3]
    $region33: #{_mvdnn_call.1} parent=1 // pred_fallthru
      _
    // Predicated region
    $region34: #{_mvdnn_call.1} parent=1 // pred_check
      _
    $region35: #{_mvdnn_call.1} parent=1 // pred_check_branch
      %329 = sbr.rel (0) target = $region37
    $region36: #{_mvdnn_call.1} parent=1 // pred_region
      %330 = dma.done [#allocation3], 128
    $region37: #{_mvdnn_call.1} parent=1 // pred_fallthru
      _
    %331 = vsyncpa [#allocation3], 1

</llo_original>
